<compile_context>
chip_gen: v7x
topology: tpu7x:2x2x1
jax: 0.10.0
libtpu: 0.0.40
codegen_flags: <defaults>
</compile_context>

<pallas_src>
import functools

import jax
import jax.numpy as jnp
from jax.experimental import pallas as pl
from jax.experimental.pallas import tpu as pltpu

_EPS = 1e-6  # torch.nn.functional.pairwise_distance default eps (added to the diff)


def _contrastive_loss_kernel(out1_ref, out2_ref, label_ref, loss_ref, acc_ref, *,
                             margin, batch, tile_b):
    i = pl.program_id(0)

    @pl.when(i == 0)
    def _init():
        acc_ref[...] = jnp.zeros_like(acc_ref)

    o1 = out1_ref[...].astype(jnp.float32)           # (TB, D)
    o2 = out2_ref[...].astype(jnp.float32)           # (TB, D)
    lbl = label_ref[...].astype(jnp.float32)         # (TB, 1)

    diff = o1 - o2 + _EPS                            # eps added per-element (PyTorch behavior)
    sq_sum = jnp.sum(diff * diff, axis=-1, keepdims=True)   # (TB, 1) == dists^2
    dist = jnp.sqrt(sq_sum)                          # only needed for the margin branch (EUP)

    pos = lbl * sq_sum                               # label * dists^2 (no sqrt->square round trip)
    neg = (1.0 - lbl) * jnp.square(jnp.maximum(margin - dist, 0.0))
    per_sample = pos + neg                           # (TB, 1)

    # Mask rows that only exist because B was padded up to a multiple of TB.
    row = jax.lax.broadcasted_iota(jnp.int32, (tile_b, 1), 0) + i * tile_b
    per_sample = jnp.where(row < batch, per_sample, 0.0)

    acc_ref[...] += jnp.sum(per_sample, axis=0, keepdims=True)   # (1, 1)

    @pl.when(i == pl.num_programs(0) - 1)
    def _finalize():
        loss_ref[...] = acc_ref[...] * jnp.float32(1.0 / batch)


def _pick_tile_b(batch, dim):
    """Largest multiple of 8 such that one (TB, D) f32 tile is <= ~2 MiB (capped at 2048)."""
    rows = max(8, (2 * 1024 * 1024) // max(1, dim * 4))
    tb = max(8, min(2048, (rows // 8) * 8))
    b_pad8 = pl.cdiv(batch, 8) * 8
    return min(tb, b_pad8)


def contrastive_loss(out1, out2, label, margin=1.0, tile_b=None):
    """out1, out2: (B, D) float; label: (B,) float/int. Returns scalar f32 loss."""
    B, D = out1.shape
    label2d = jnp.asarray(label).reshape(B, 1)

    if tile_b is None:
        tile_b = _pick_tile_b(B, D)
    tile_b = max(8, (int(tile_b) // 8) * 8)
    tile_b = min(tile_b, pl.cdiv(B, 8) * 8)

    b_pad = pl.cdiv(B, tile_b) * tile_b
    num_tiles = b_pad // tile_b

    if b_pad != B:
        pad = b_pad - B
        out1 = jnp.pad(out1, ((0, pad), (0, 0)))
        out2 = jnp.pad(out2, ((0, pad), (0, 0)))
        label2d = jnp.pad(label2d, ((0, pad), (0, 0)))

    kernel = functools.partial(
        _contrastive_loss_kernel, margin=float(margin), batch=B, tile_b=tile_b)

    out = pl.pallas_call(
        kernel,
        out_shape=jax.ShapeDtypeStruct((1, 1), jnp.float32),
        grid_spec=pltpu.PrefetchScalarGridSpec(
            num_scalar_prefetch=0,
            grid=(num_tiles,),
            in_specs=[
                pl.BlockSpec((tile_b, D), lambda i: (i, 0)),
                pl.BlockSpec((tile_b, D), lambda i: (i, 0)),
                pl.BlockSpec((tile_b, 1), lambda i: (i, 0)),
            ],
            out_specs=pl.BlockSpec((1, 1), lambda i: (0, 0)),
            scratch_shapes=[pltpu.VMEM((1, 1), jnp.float32)],
        ),
        compiler_params=pltpu.CompilerParams(
            dimension_semantics=("arbitrary",),      # serial reduction over batch tiles
            vmem_limit_bytes=32 * 1024 * 1024,
        ),
    )(out1, out2, label2d)
    return out[0, 0]


def _reference_loss(out1, out2, label, margin=1.0):
    diff = out1.astype(jnp.float32) - out2.astype(jnp.float32) + _EPS
    dist = jnp.sqrt(jnp.sum(diff * diff, axis=-1))
    lbl = label.astype(jnp.float32)
    loss = lbl * dist**2 + (1.0 - lbl) * jnp.maximum(margin - dist, 0.0) ** 2
    return jnp.mean(loss)


if __name__ == "__main__":
    key = jax.random.PRNGKey(0)
    k1, k2, k3, k4, k5, k6 = jax.random.split(key, 6)

    # Small shapes consistent with a Siamese embedding head.
    B, D = 8, 32
    out1 = jax.random.normal(k1, (B, D), dtype=jnp.float32)
    out2 = jax.random.normal(k2, (B, D), dtype=jnp.float32)
    label = jax.random.bernoulli(k3, 0.5, (B,)).astype(jnp.float32)

    loss = contrastive_loss(out1, out2, label, margin=1.0)
    jax.block_until_ready(loss)
    ref = _reference_loss(out1, out2, label, margin=1.0)
    assert jnp.allclose(loss, ref, rtol=1e-5, atol=1e-5), (loss, ref)

    # Multi-tile + padding/masking path (B not a multiple of the tile, forced small tile).
    B2, D2 = 50, 256
    a = jax.random.normal(k4, (B2, D2), dtype=jnp.float32)
    b = jax.random.normal(k5, (B2, D2), dtype=jnp.float32)
    lbl2 = jax.random.bernoulli(k6, 0.5, (B2,)).astype(jnp.float32)

    loss2 = contrastive_loss(a, b, lbl2, margin=1.0, tile_b=16)
    jax.block_until_ready(loss2)
    ref2 = _reference_loss(a, b, lbl2, margin=1.0)
    assert jnp.allclose(loss2, ref2, rtol=1e-5, atol=1e-5), (loss2, ref2)

    print("KERNEL_OK")
</pallas_src>

<mosaic_0001>
module attributes {stable_mosaic.version = 11 : i64} {
  func.func @_contrastive_loss_kernel(%arg0: i32, %arg1: memref<8x32xf32, #tpu.memory_space<vmem>>, %arg2: memref<8x32xf32, #tpu.memory_space<vmem>>, %arg3: memref<8x1xf32, #tpu.memory_space<vmem>>, %arg4: memref<1x1xf32, #tpu.memory_space<vmem>>, %arg5: memref<1x1xf32, #tpu.memory_space<vmem>>) attributes {dimension_semantics = [#tpu.dimension_semantics<arbitrary>], iteration_bounds = array<i64: 1>, scalar_prefetch = 0 : i64, scratch_operands = 1 : i64, tpu.core_type = #tpu.core_type<tc>, window_params = [{transform_indices = @transform_0, window_bounds = array<i64: 8, 32>}, {transform_indices = @transform_1, window_bounds = array<i64: 8, 32>}, {transform_indices = @transform_2, window_bounds = array<i64: 8, 1>}, {pipeline_mode = #tpu.pipeline_mode<synchronous>, transform_indices = @transform_3, window_bounds = array<i64: 1, 1>}]} {
    %c0_i32 = arith.constant 0 : i32
    %0 = arith.cmpi eq, %arg0, %c0_i32 : i32
    %1 = arith.extui %0 : i1 to i32
    %c0_i32_0 = arith.constant 0 : i32
    %2 = arith.cmpi ne, %1, %c0_i32_0 : i32
    scf.if %2 {
      %cst_19 = arith.constant 0.000000e+00 : f32
      %39 = vector.broadcast %cst_19 : f32 to vector<1x1xf32>
      %c0_20 = arith.constant 0 : index
      %c0_21 = arith.constant 0 : index
      %40 = vector.load %arg5[%c0_20, %c0_21] : memref<1x1xf32, #tpu.memory_space<vmem>>, vector<1x1xf32>
      tpu.vector_store %arg5[%c0_20, %c0_21], %39 {strides = array<i32>} : memref<1x1xf32, #tpu.memory_space<vmem>>, vector<1x1xf32>,
    } else {
    }
    %c0 = arith.constant 0 : index
    %c0_1 = arith.constant 0 : index
    %3 = vector.load %arg1[%c0, %c0_1] : memref<8x32xf32, #tpu.memory_space<vmem>>, vector<8x32xf32>
    %c0_2 = arith.constant 0 : index
    %c0_3 = arith.constant 0 : index
    %4 = vector.load %arg2[%c0_2, %c0_3] : memref<8x32xf32, #tpu.memory_space<vmem>>, vector<8x32xf32>
    %c0_4 = arith.constant 0 : index
    %c0_5 = arith.constant 0 : index
    %5 = vector.load %arg3[%c0_4, %c0_5] : memref<8x1xf32, #tpu.memory_space<vmem>>, vector<8x1xf32>
    %6 = arith.subf %3, %4 : vector<8x32xf32>
    %cst = arith.constant 9.99999997E-7 : f32
    %7 = vector.broadcast %cst : f32 to vector<8x32xf32>
    %8 = arith.addf %6, %7 : vector<8x32xf32>
    %9 = arith.mulf %8, %8 : vector<8x32xf32>
    %cst_6 = arith.constant dense<0.000000e+00> : vector<8xf32>
    %10 = vector.multi_reduction <add>, %9, %cst_6 [1] : vector<8x32xf32> to vector<8xf32>
    %11 = vector.shape_cast %10 : vector<8xf32> to vector<8x1xf32>
    %12 = math.sqrt %11 : vector<8x1xf32>
    %13 = arith.mulf %5, %11 : vector<8x1xf32>
    %cst_7 = arith.constant 1.000000e+00 : f32
    %14 = vector.broadcast %cst_7 : f32 to vector<8x1xf32>
    %15 = arith.subf %14, %5 : vector<8x1xf32>
    %cst_8 = arith.constant 1.000000e+00 : f32
    %16 = vector.broadcast %cst_8 : f32 to vector<8x1xf32>
    %17 = arith.subf %16, %12 : vector<8x1xf32>
    %cst_9 = arith.constant 0.000000e+00 : f32
    %18 = vector.broadcast %cst_9 : f32 to vector<8x1xf32>
    %19 = arith.maximumf %17, %18 : vector<8x1xf32>
    %20 = arith.mulf %19, %19 : vector<8x1xf32>
    %21 = arith.mulf %15, %20 : vector<8x1xf32>
    %22 = arith.addf %13, %21 : vector<8x1xf32>
    %23 = tpu.iota {dimensions = array<i32: 0>} : vector<8x1xi32>
    %c8_i32 = arith.constant 8 : i32
    %24 = arith.muli %arg0, %c8_i32 : i32
    %25 = vector.broadcast %24 : i32 to vector<8x1xi32>
    %26 = arith.addi %23, %25 : vector<8x1xi32>
    %c8_i32_10 = arith.constant 8 : i32
    %27 = vector.broadcast %c8_i32_10 : i32 to vector<8x1xi32>
    %28 = arith.cmpi slt, %26, %27 : vector<8x1xi32>
    %cst_11 = arith.constant 0.000000e+00 : f32
    %29 = vector.broadcast %cst_11 : f32 to vector<8x1xf32>
    %30 = arith.select %28, %22, %29 : vector<8x1xi1>, vector<8x1xf32>
    %c0_12 = arith.constant 0 : index
    %c0_13 = arith.constant 0 : index
    %31 = vector.load %arg5[%c0_12, %c0_13] : memref<1x1xf32, #tpu.memory_space<vmem>>, vector<1x1xf32>
    %cst_14 = arith.constant dense<0.000000e+00> : vector<1xf32>
    %32 = vector.multi_reduction <add>, %30, %cst_14 [0] : vector<8x1xf32> to vector<1xf32>
    %33 = vector.shape_cast %32 : vector<1xf32> to vector<1x1xf32>
    %34 = arith.addf %31, %33 : vector<1x1xf32>
    %c0_15 = arith.constant 0 : index
    %c0_16 = arith.constant 0 : index
    %35 = vector.load %arg5[%c0_15, %c0_16] : memref<1x1xf32, #tpu.memory_space<vmem>>, vector<1x1xf32>
    tpu.vector_store %arg5[%c0_15, %c0_16], %34 {strides = array<i32>} : memref<1x1xf32, #tpu.memory_space<vmem>>, vector<1x1xf32>,
    %c0_i32_17 = arith.constant 0 : i32
    %36 = arith.cmpi eq, %arg0, %c0_i32_17 : i32
    %37 = arith.extui %36 : i1 to i32
    %c0_i32_18 = arith.constant 0 : i32
    %38 = arith.cmpi ne, %37, %c0_i32_18 : i32
    scf.if %38 {
      %c0_19 = arith.constant 0 : index
      %c0_20 = arith.constant 0 : index
      %39 = vector.load %arg5[%c0_19, %c0_20] : memref<1x1xf32, #tpu.memory_space<vmem>>, vector<1x1xf32>
      %cst_21 = arith.constant 1.250000e-01 : f32
      %40 = vector.broadcast %cst_21 : f32 to vector<1x1xf32>
      %41 = arith.mulf %39, %40 : vector<1x1xf32>
      %c0_22 = arith.constant 0 : index
      %c0_23 = arith.constant 0 : index
      %42 = vector.load %arg4[%c0_22, %c0_23] : memref<1x1xf32, #tpu.memory_space<vmem>>, vector<1x1xf32>
      tpu.vector_store %arg4[%c0_22, %c0_23], %41 {strides = array<i32>} : memref<1x1xf32, #tpu.memory_space<vmem>>, vector<1x1xf32>,
    } else {
    }
    return
  }
  func.func @transform_0(%arg0: i32) -> (i32, i32) {
    %c0_i32 = arith.constant 0 : i32
    %c0_i32_0 = arith.constant 0 : i32
    return %arg0, %c0_i32 : i32, i32
  }
  func.func @transform_1(%arg0: i32) -> (i32, i32) {
    %c0_i32 = arith.constant 0 : i32
    %c0_i32_0 = arith.constant 0 : i32
    return %arg0, %c0_i32 : i32, i32
  }
  func.func @transform_2(%arg0: i32) -> (i32, i32) {
    %c0_i32 = arith.constant 0 : i32
    %c0_i32_0 = arith.constant 0 : i32
    return %arg0, %c0_i32 : i32, i32
  }
  func.func @transform_3(%arg0: i32) -> (i32, i32) {
    %c0_i32 = arith.constant 0 : i32
    %c0_i32_0 = arith.constant 0 : i32
    %c0_i32_1 = arith.constant 0 : i32
    return %c0_i32, %c0_i32_0 : i32, i32
  }
}

</mosaic_0001>

<llo_original>
// kernel: tpu_custom_call.1
$region0: #{tpu_custom_call.1}
  #allocation0 [shape = 'u32[]', space=smem, size = 0x4, offset = 0x4, fixed_abs, tag = 'smem constant byte address 0x4 - core index']
  #allocation1 [shape = 'u32[144,128]{1,0:T(1,128)}', space=vmem, size = 0x12000, scoped, tag = 'internal scratch']
  #allocation2 [shape = 'f32[1,1]{1,0:T(1,128)}', space=vmem, size = 0x200, scoped, tag = 'scratch operand']
  %s0 = inlined_call_operand.vmem [shape: f32[8,32], index: 0, kind: input, shape index: {}]
  %s1 = inlined_call_operand.hbm [shape: f32[8,32], index: 1, kind: input, shape index: {}]
  %s2 = inlined_call_operand.vmem [shape: f32[8,1], index: 2, kind: input, shape index: {}]
  %s3 = inlined_call_operand.hbm [shape: f32[1,1], index: 3, kind: output, shape index: {}]
  %s4 = sld [smem:[#allocation0]]
  $region34: #{tpu_custom_call.1} parent=0
    _
  %s6 = ssub.s32 1, %s4
  %s7 = scalar_select 0, %s6, %s4
  $region1: #{tpu_custom_call.1} parent=0
    #allocation3 [shape = 'u8[4096]{0}', space=vmem, size = 0x1000, scoped, tag = 'input window, operand 1, single buffered']
    #allocation4 [shape = 's32[1]{0}', space=sflag, size = 0x4, scoped, tag = 'scoped memory for tpu_custom_call.1']
    #allocation5 [shape = 's32[1]{0}', space=sflag, size = 0x4, scoped, tag = 'scoped memory for tpu_custom_call.1']
    #allocation6 [shape = 'u8[512]{0}', space=vmem, size = 0x400, scoped, tag = 'output window, operand 0, single buffered']
    %8 = vsyncpa [#allocation4], 0
    %9 = vsyncpa [#allocation5], 0
    // Predicated region
    $region2: #{tpu_custom_call.1} parent=1 // pred_check
      _
    $region3: #{tpu_custom_call.1} parent=1 // pred_check_branch
      %11 = sbr.rel (0) target = $region5
    $region4: #{tpu_custom_call.1} parent=1 // pred_region
      _
    $region5: #{tpu_custom_call.1} parent=1 // pred_fallthru
      _
    // Predicated region
    $region6: #{tpu_custom_call.1} parent=1 // pred_check
      _
    $region7: #{tpu_custom_call.1} parent=1 // pred_check_branch
      %13 = sbr.rel (0) target = $region9
    $region8: #{tpu_custom_call.1} parent=1 // pred_region
      %s15 = ssub.s32 128, 128
      %16 = vsyncadd [#allocation4], %s15
      %s18 = sshll.u32 [#allocation3], 4
      %s19 = int_to_ptr.vmem [resolvable:$true] %s18
      %21 = dma.hbm_to_vmem [thread:$0]  %s1, 128, %s19, [#allocation4]
    $region9: #{tpu_custom_call.1} parent=1 // pred_fallthru
      _
    // Predicated region
    $region10: #{tpu_custom_call.1} parent=1 // pred_check
      _
    $region11: #{tpu_custom_call.1} parent=1 // pred_check_branch
      %23 = sbr.rel (0) target = $region13
    $region12: #{tpu_custom_call.1} parent=1 // pred_region
      _
    $region13: #{tpu_custom_call.1} parent=1 // pred_fallthru
      _
    // Predicated region
    $region14: #{tpu_custom_call.1} parent=1 // pred_check
      _
    $region15: #{tpu_custom_call.1} parent=1 // pred_check_branch
      %25 = sbr.rel (0) target = $region17
    $region16: #{tpu_custom_call.1} parent=1 // pred_region
      %26 = dma.done [#allocation4], 128
    $region17: #{tpu_custom_call.1} parent=1 // pred_fallthru
      _
    %p27 = scmp.eq.s32.totalorder 0, 0
    // Predicated region
    $region18: #{tpu_custom_call.1} parent=1 // pred_check
      %p28 = pneg %p27
    $region19: #{tpu_custom_call.1} parent=1 // pred_check_branch
      %30 = sbr.rel (%p28) target = $region21
    $region20: #{tpu_custom_call.1} parent=1 // pred_region
      %vm31 = vcmask 0
      %32 = vst.msk [vmem:[#allocation2] sm:$0x1] %vm31, 0.0
    $region21: #{tpu_custom_call.1} parent=1 // pred_fallthru
      _
    %v33 = vld [vmem:[%s0] sm:$0xff]
    %v34 = vld [vmem:[#allocation3] sm:$0xff]
    %v35 = vld [vmem:[%s2] sm:$0xff]
    %v36 = vsub.f32 %v33, %v34
    %v37 = vadd.f32 %v36, 1e-06
    %v38 = vmul.f32 %v37, %v37
    %vm39 = vcmask 261120
    %v40 = vsel %vm39, %v38, 0.0
    %41 = vadd.xlane.f32.xlu0 %v40
    %v42 = vpop.xlane.xlu0 %41
    %v43 = vrsqrt.pop %v42
    %v44 = vmul.f32 %v42, %v43
    %vm45 = vcmp.eq.f32.partialorder %v42, inf
    %v46 = vsel %vm45, %v42, %v44
    %vm47 = vcmp.eq.f32.partialorder %v42, 0.0
    %v48 = vand.u32 %v42, 2147483648
    %v49 = vsel %vm47, %v48, %v46
    %v50 = vmul.f32 %v35, %v42
    %v51 = vsub.f32 1.0, %v35
    %v52 = vsub.f32 1.0, %v49
    %v53 = vmax.f32 %v52, 0.0
    %v54 = vmul.f32 %v53, %v53
    %v55 = vmul.f32 %v51, %v54
    %v56 = vadd.f32 %v50, %v55
    %v57 = vlaneseq
    %v58 = vshrl.u32 %v57, 7
    %s59 = smul.u32 0, 8
    %v60 = vstv %s59
    %v61 = vadd.s32 %v58, %v60
    %vm62 = vcmp.lt.s32.totalorder %v61, 8
    %v63 = vsel %vm62, %v56, 0.0
    %v64 = vld [vmem:[#allocation2] sm:$0x1]
    %vm65 = vcmask 7168
    %v66 = vsel %vm65, %v63, 0.0
    %v67 = vrot.slane %v66, 4
    %v68 = vadd.f32 %v66, %v67
    %v69 = vrot.slane %v68, 2
    %v70 = vadd.f32 %v68, %v69
    %v71 = vrot.slane %v70, 1
    %v72 = vadd.f32 %v70, %v71
    %v73 = vadd.f32 %v64, %v72
    %vm74 = vcmask 0
    %75 = vst.msk [vmem:[#allocation2] sm:$0x1] %vm74, %v73
    // Predicated region
    $region22: #{tpu_custom_call.1} parent=1 // pred_check
      %p76 = pneg %p27
    $region23: #{tpu_custom_call.1} parent=1 // pred_check_branch
      %78 = sbr.rel (%p76) target = $region25
    $region24: #{tpu_custom_call.1} parent=1 // pred_region
      %v79 = vld [vmem:[#allocation2] sm:$0x1]
      %v80 = vmul.f32 %v79, 0.125
      %81 = vst.msk [vmem:[#allocation6] sm:$0x1] %vm74, %v80
    $region25: #{tpu_custom_call.1} parent=1 // pred_fallthru
      _
    // Predicated region
    $region26: #{tpu_custom_call.1} parent=1 // pred_check
      _
    $region27: #{tpu_custom_call.1} parent=1 // pred_check_branch
      %83 = sbr.rel (0) target = $region29
    $region28: #{tpu_custom_call.1} parent=1 // pred_region
      %s85 = ssub.s32 16, 16
      %86 = vsyncadd [#allocation5], %s85
      %s88 = sshll.u32 [#allocation6], 4
      %s89 = int_to_ptr.vmem [resolvable:$true] %s88
      %91 = dma.vmem_to_hbm [thread:$0]  %s89, 16, %s3, [#allocation5]
    $region29: #{tpu_custom_call.1} parent=1 // pred_fallthru
      _
    // Predicated region
    $region30: #{tpu_custom_call.1} parent=1 // pred_check
      _
    $region31: #{tpu_custom_call.1} parent=1 // pred_check_branch
      %93 = sbr.rel (0) target = $region33
    $region32: #{tpu_custom_call.1} parent=1 // pred_region
      %94 = dma.done [#allocation5], 16
    $region33: #{tpu_custom_call.1} parent=1 // pred_fallthru
      _
    %95 = vsyncpa [#allocation4], 1
    %96 = vsyncpa [#allocation5], 1

</llo_original>
